<compile_context>
chip_gen: v5e
topology: v5e:2x2
jax: 0.10.0
libtpu: 0.0.40
codegen_flags: <defaults>
</compile_context>

<pallas_src>
import functools

import jax
import jax.numpy as jnp
from jax.experimental import pallas as pl
from jax.experimental.pallas import tpu as pltpu


def _gru_update_kernel(x_ref, h_ref, wih_t_ref, whh_t_ref, b_i_ref, b_hn_ref,
                       out_ref, *, hidden):
    """One row-tile of h' = GRUCell(x, h); gates packed [r | z | n] on lanes."""
    H = hidden
    x = x_ref[...]                       # (Tr, Mi) native dtype
    h = h_ref[...]                       # (Tr, H)  native dtype

    # One fused 3-gate matmul per source (not six tiny-K dots). Operands stay
    # in their native dtype; accumulate in f32.
    gi = jnp.dot(x, wih_t_ref[...],
                 preferred_element_type=jnp.float32) + b_i_ref[...]   # (Tr, 3H)
    gh = jnp.dot(h, whh_t_ref[...],
                 preferred_element_type=jnp.float32)                  # (Tr, 3H)

    # NOTE: if H % 128 != 0 these gate slices cut inside a 128-lane vreg (minor
    # relayout cost); production should pick H as a multiple of 128.
    # TODO(synk): for lane-dense stores at small H, keep node state transposed
    # (H, N) across MPNN iterations so rows land on the lane axis.
    r = jax.nn.sigmoid(gi[:, 0 * H:1 * H] + gh[:, 0 * H:1 * H])
    z = jax.nn.sigmoid(gi[:, 1 * H:2 * H] + gh[:, 1 * H:2 * H])
    # torch.nn.GRUCell: n = tanh(W_in x + b_in + r * (W_hn h + b_hn))
    n = jnp.tanh(gi[:, 2 * H:3 * H] + r * (gh[:, 2 * H:3 * H] + b_hn_ref[...]))

    h32 = h.astype(jnp.float32)
    out_ref[...] = ((1.0 - z) * n + z * h32).astype(out_ref.dtype)    # (Tr, H)


def _choose_row_tile(n_rows, block_rows, sub):
    """Pick (tile, padded_rows); tile is a multiple of `sub` or the full extent."""
    if n_rows <= block_rows:
        # Whole problem fits in one tile: split exactly in two when that stays a
        # multiple of `sub`, so both v7x TensorCores get a block.
        if n_rows % (2 * sub) == 0:
            return n_rows // 2, n_rows
        return n_rows, n_rows
    cap = max(sub, (block_rows // sub) * sub)
    if n_rows % sub == 0:
        # Largest tile in [cap/2, cap] (multiple of `sub`) dividing n_rows exactly
        # -> no pad/slice HBM copies around a memory-bound kernel.
        for t in range(cap, max(sub, cap // 2) - 1, -sub):
            if n_rows % t == 0:
                return t, n_rows
    # Ragged fall-back: pad only the final tile (still better than tiny tiles).
    return cap, pl.cdiv(n_rows, cap) * cap


@functools.partial(jax.jit, static_argnames=("block_rows",))
def gru_update(nodes, message, w_ih, w_hh, b_ih, b_hh, *, block_rows=1024):
    """Update(nodes, message) == GRUCell(message, nodes) per row.

    nodes (B,V,H), message (B,V,Mi). Weights in torch layout: w_ih (3H,Mi),
    w_hh (3H,H), b_ih/b_hh (3H,), gate order r,z,n. Returns (B,V,H) in
    nodes.dtype.
    """
    B, V, H = nodes.shape
    Mi = message.shape[-1]
    N = B * V

    # --- one-time (tiny) parameter preprocessing ---------------------------
    wih_t = jnp.asarray(w_ih).T.astype(message.dtype)      # (Mi, 3H)
    whh_t = jnp.asarray(w_hh).T.astype(nodes.dtype)        # (H, 3H)
    bih32 = jnp.asarray(b_ih, jnp.float32)
    bhh32 = jnp.asarray(b_hh, jnp.float32)
    # Fold b_hh into the input bias for the r/z gates; keep b_hn separate
    # because torch keeps it inside r * (W_hn h + b_hn).
    b_i = jnp.concatenate([bih32[:2 * H] + bhh32[:2 * H],
                           bih32[2 * H:]]).reshape(1, 3 * H)
    b_hn = bhh32[2 * H:].reshape(1, H)

    # --- row tiling: no astype copies of the big activations ---------------
    x = message.reshape(N, Mi)            # free reshape, native dtype
    h = nodes.reshape(N, H)               # free reshape, native dtype

    sub = max(8, 32 // min(x.dtype.itemsize, h.dtype.itemsize))   # 8 f32 / 16 bf16
    Tr, Np = _choose_row_tile(N, block_rows, sub)
    if Np != N:                           # rare ragged case only
        x = jnp.pad(x, ((0, Np - N), (0, 0)))
        h = jnp.pad(h, ((0, Np - N), (0, 0)))

    out_dtype = nodes.dtype

    # Grid-invariant params: single-buffered (no second VMEM copy, no re-DMA).
    def const_spec(shape):
        return pl.BlockSpec(shape, lambda i: (0, 0), pipeline_mode=pl.Buffered(1))

    # VMEM budget: raise the scoped limit only when the estimate needs it
    # (v7x physical VMEM is 64 MiB, half of v5e/v6e).
    est_vmem = (2 * Tr * (Mi * x.dtype.itemsize
                          + H * h.dtype.itemsize
                          + H * jnp.dtype(out_dtype).itemsize)        # pipelined tiles
                + 3 * H * (Mi * wih_t.dtype.itemsize + H * whh_t.dtype.itemsize)
                + 14 * Tr * H * 4)                                    # f32 gate temps
    cparams = {"dimension_semantics": ("parallel",)}
    if est_vmem > 30 * 1024 * 1024:
        cparams["vmem_limit_bytes"] = int(min(est_vmem * 5 // 4, 60 * 1024 * 1024))

    out = pl.pallas_call(
        functools.partial(_gru_update_kernel, hidden=H),
        out_shape=jax.ShapeDtypeStruct((Np, H), out_dtype),
        grid_spec=pltpu.PrefetchScalarGridSpec(
            num_scalar_prefetch=0,
            grid=(Np // Tr,),
            in_specs=[
                pl.BlockSpec((Tr, Mi), lambda i: (i, 0)),     # message rows (x)
                pl.BlockSpec((Tr, H), lambda i: (i, 0)),      # node rows (h)
                const_spec((Mi, 3 * H)),                      # W_ih^T, fused gates
                const_spec((H, 3 * H)),                       # W_hh^T, fused gates
                const_spec((1, 3 * H)),                       # b_ih + [b_hr, b_hz, 0]
                const_spec((1, H)),                           # b_hn
            ],
            out_specs=pl.BlockSpec((Tr, H), lambda i: (i, 0)),
        ),
        input_output_aliases={1: 0},      # GRU replaces node state in place
        compiler_params=pltpu.CompilerParams(**cparams),
    )(x, h, wih_t, whh_t, b_i, b_hn)

    if Np != N:
        out = out[:N]
    return out.reshape(B, V, H)


if __name__ == "__main__":
    B, V = 2, 8
    H = 32        # node_hidden_size
    Mi = 32       # message_hidden_size

    key = jax.random.PRNGKey(0)
    ks = jax.random.split(key, 6)

    nodes = jax.random.normal(ks[0], (B, V, H), jnp.float32)
    message = jax.random.normal(ks[1], (B, V, Mi), jnp.float32)

    # nn.GRUCell-style init: uniform(-1/sqrt(H), 1/sqrt(H)); gate order r, z, n.
    bound = 1.0 / (H ** 0.5)
    wih = jax.random.uniform(ks[2], (3 * H, Mi), jnp.float32, -bound, bound)
    whh = jax.random.uniform(ks[3], (3 * H, H), jnp.float32, -bound, bound)
    bih = jax.random.uniform(ks[4], (3 * H,), jnp.float32, -bound, bound)
    bhh = jax.random.uniform(ks[5], (3 * H,), jnp.float32, -bound, bound)

    # f32 path (exact): N=16 rows -> two 8-row tiles, grid=(2,), no padding.
    out = gru_update(nodes, message, wih, whh, bih, bhh)
    out = jax.block_until_ready(out)

    # Pure-JAX reference mirroring torch.nn.GRUCell exactly.
    x2 = message.reshape(B * V, Mi)
    h2 = nodes.reshape(B * V, H)
    gi = x2 @ wih.T + bih
    gh = h2 @ whh.T + bhh
    r = jax.nn.sigmoid(gi[:, :H] + gh[:, :H])
    z = jax.nn.sigmoid(gi[:, H:2 * H] + gh[:, H:2 * H])
    n = jnp.tanh(gi[:, 2 * H:] + r * gh[:, 2 * H:])
    ref = ((1.0 - z) * n + z * h2).reshape(B, V, H)

    assert out.shape == (B, V, H) and out.dtype == jnp.float32
    err = float(jnp.max(jnp.abs(out - ref)))
    assert jnp.allclose(out, ref, atol=1e-5, rtol=1e-5), err

    # bf16 path smoke test (native-dtype DMA + bf16 MXU operands, f32 gate math).
    out_bf16 = gru_update(nodes.astype(jnp.bfloat16), message.astype(jnp.bfloat16),
                          wih, whh, bih, bhh)
    out_bf16 = jax.block_until_ready(out_bf16)
    assert out_bf16.shape == (B, V, H) and out_bf16.dtype == jnp.bfloat16
    out_bf16_f32 = out_bf16.astype(jnp.float32)
    assert bool(jnp.all(jnp.isfinite(out_bf16_f32)))
    # Loose tolerance: bf16 operand/store rounding only (accumulation is f32).
    assert jnp.allclose(out_bf16_f32, ref, atol=2e-1, rtol=2e-1)

    print("KERNEL_OK")
</pallas_src>

<mosaic_0001>
module attributes {stable_mosaic.version = 11 : i64} {
  func.func @_gru_update_kernel(%arg0: i32, %arg1: memref<8x32xf32, #tpu.memory_space<vmem>>, %arg2: memref<8x32xf32, #tpu.memory_space<vmem>>, %arg3: memref<32x96xf32, #tpu.memory_space<vmem>>, %arg4: memref<32x96xf32, #tpu.memory_space<vmem>>, %arg5: memref<1x96xf32, #tpu.memory_space<vmem>>, %arg6: memref<1x32xf32, #tpu.memory_space<vmem>>, %arg7: memref<8x32xf32, #tpu.memory_space<vmem>>) attributes {dimension_semantics = [#tpu.dimension_semantics<parallel>], iteration_bounds = array<i64: 2>, scalar_prefetch = 0 : i64, scratch_operands = 0 : i64, tpu.core_type = #tpu.core_type<tc>, window_params = [{transform_indices = @transform_0, window_bounds = array<i64: 8, 32>}, {transform_indices = @transform_1, window_bounds = array<i64: 8, 32>}, {pipeline_mode = #tpu.pipeline_mode<synchronous>, transform_indices = @transform_2, window_bounds = array<i64: 32, 96>}, {pipeline_mode = #tpu.pipeline_mode<synchronous>, transform_indices = @transform_3, window_bounds = array<i64: 32, 96>}, {pipeline_mode = #tpu.pipeline_mode<synchronous>, transform_indices = @transform_4, window_bounds = array<i64: 1, 96>}, {pipeline_mode = #tpu.pipeline_mode<synchronous>, transform_indices = @transform_5, window_bounds = array<i64: 1, 32>}, {transform_indices = @transform_6, window_bounds = array<i64: 8, 32>}]} {
    %c0 = arith.constant 0 : index
    %c0_0 = arith.constant 0 : index
    %0 = vector.load %arg1[%c0, %c0_0] : memref<8x32xf32, #tpu.memory_space<vmem>>, vector<8x32xf32>
    %c0_1 = arith.constant 0 : index
    %c0_2 = arith.constant 0 : index
    %1 = vector.load %arg2[%c0_1, %c0_2] : memref<8x32xf32, #tpu.memory_space<vmem>>, vector<8x32xf32>
    %c0_3 = arith.constant 0 : index
    %c0_4 = arith.constant 0 : index
    %2 = vector.load %arg3[%c0_3, %c0_4] : memref<32x96xf32, #tpu.memory_space<vmem>>, vector<32x96xf32>
    %cst = arith.constant dense<0.000000e+00> : vector<8x96xf32>
    %3 = tpu.matmul %0, %2, %cst {dimension_numbers = #tpu.dot_dimension_numbers<[1], [0], [0], [1], [0, 0, 1, 1], [], []>} : vector<8x32xf32>, vector<32x96xf32>, vector<8x96xf32> -> vector<8x96xf32>
    %c0_5 = arith.constant 0 : index
    %c0_6 = arith.constant 0 : index
    %4 = vector.load %arg5[%c0_5, %c0_6] : memref<1x96xf32, #tpu.memory_space<vmem>>, vector<1x96xf32>
    %5 = vector.broadcast %4 : vector<1x96xf32> to vector<8x96xf32>
    %6 = arith.addf %3, %5 : vector<8x96xf32>
    %c0_7 = arith.constant 0 : index
    %c0_8 = arith.constant 0 : index
    %7 = vector.load %arg4[%c0_7, %c0_8] : memref<32x96xf32, #tpu.memory_space<vmem>>, vector<32x96xf32>
    %cst_9 = arith.constant dense<0.000000e+00> : vector<8x96xf32>
    %8 = tpu.matmul %1, %7, %cst_9 {dimension_numbers = #tpu.dot_dimension_numbers<[1], [0], [0], [1], [0, 0, 1, 1], [], []>} : vector<8x32xf32>, vector<32x96xf32>, vector<8x96xf32> -> vector<8x96xf32>
    %9 = vector.extract_strided_slice %6 {offsets = [0, 0], sizes = [8, 32], strides = [1, 1]} : vector<8x96xf32> to vector<8x32xf32>
    %10 = vector.extract_strided_slice %8 {offsets = [0, 0], sizes = [8, 32], strides = [1, 1]} : vector<8x96xf32> to vector<8x32xf32>
    %11 = arith.addf %9, %10 : vector<8x32xf32>
    %12 = arith.negf %11 : vector<8x32xf32>
    %13 = math.exp %12 : vector<8x32xf32>
    %cst_10 = arith.constant 1.000000e+00 : f32
    %14 = vector.broadcast %cst_10 : f32 to vector<8x32xf32>
    %15 = arith.addf %14, %13 : vector<8x32xf32>
    %16 = arith.divf %14, %15 : vector<8x32xf32>
    %17 = vector.extract_strided_slice %6 {offsets = [0, 32], sizes = [8, 32], strides = [1, 1]} : vector<8x96xf32> to vector<8x32xf32>
    %18 = vector.extract_strided_slice %8 {offsets = [0, 32], sizes = [8, 32], strides = [1, 1]} : vector<8x96xf32> to vector<8x32xf32>
    %19 = arith.addf %17, %18 : vector<8x32xf32>
    %20 = arith.negf %19 : vector<8x32xf32>
    %21 = math.exp %20 : vector<8x32xf32>
    %cst_11 = arith.constant 1.000000e+00 : f32
    %22 = vector.broadcast %cst_11 : f32 to vector<8x32xf32>
    %23 = arith.addf %22, %21 : vector<8x32xf32>
    %24 = arith.divf %22, %23 : vector<8x32xf32>
    %25 = vector.extract_strided_slice %6 {offsets = [0, 64], sizes = [8, 32], strides = [1, 1]} : vector<8x96xf32> to vector<8x32xf32>
    %26 = vector.extract_strided_slice %8 {offsets = [0, 64], sizes = [8, 32], strides = [1, 1]} : vector<8x96xf32> to vector<8x32xf32>
    %c0_12 = arith.constant 0 : index
    %c0_13 = arith.constant 0 : index
    %27 = vector.load %arg6[%c0_12, %c0_13] : memref<1x32xf32, #tpu.memory_space<vmem>>, vector<1x32xf32>
    %28 = vector.broadcast %27 : vector<1x32xf32> to vector<8x32xf32>
    %29 = arith.addf %26, %28 : vector<8x32xf32>
    %30 = arith.mulf %16, %29 : vector<8x32xf32>
    %31 = arith.addf %25, %30 : vector<8x32xf32>
    %32 = math.tanh %31 : vector<8x32xf32>
    %cst_14 = arith.constant 1.000000e+00 : f32
    %33 = vector.broadcast %cst_14 : f32 to vector<8x32xf32>
    %34 = arith.subf %33, %24 : vector<8x32xf32>
    %35 = arith.mulf %34, %32 : vector<8x32xf32>
    %36 = arith.mulf %24, %1 : vector<8x32xf32>
    %37 = arith.addf %35, %36 : vector<8x32xf32>
    %c0_15 = arith.constant 0 : index
    %c0_16 = arith.constant 0 : index
    %38 = vector.load %arg7[%c0_15, %c0_16] : memref<8x32xf32, #tpu.memory_space<vmem>>, vector<8x32xf32>
    tpu.vector_store %arg7[%c0_15, %c0_16], %37 {strides = array<i32>} : memref<8x32xf32, #tpu.memory_space<vmem>>, vector<8x32xf32>,
    return
  }
  func.func @transform_0(%arg0: i32) -> (i32, i32) {
    %c0_i32 = arith.constant 0 : i32
    %c0_i32_0 = arith.constant 0 : i32
    return %arg0, %c0_i32 : i32, i32
  }
  func.func @transform_1(%arg0: i32) -> (i32, i32) {
    %c0_i32 = arith.constant 0 : i32
    %c0_i32_0 = arith.constant 0 : i32
    return %arg0, %c0_i32 : i32, i32
  }
  func.func @transform_2(%arg0: i32) -> (i32, i32) {
    %c0_i32 = arith.constant 0 : i32
    %c0_i32_0 = arith.constant 0 : i32
    %c0_i32_1 = arith.constant 0 : i32
    return %c0_i32, %c0_i32_0 : i32, i32
  }
  func.func @transform_3(%arg0: i32) -> (i32, i32) {
    %c0_i32 = arith.constant 0 : i32
    %c0_i32_0 = arith.constant 0 : i32
    %c0_i32_1 = arith.constant 0 : i32
    return %c0_i32, %c0_i32_0 : i32, i32
  }
  func.func @transform_4(%arg0: i32) -> (i32, i32) {
    %c0_i32 = arith.constant 0 : i32
    %c0_i32_0 = arith.constant 0 : i32
    %c0_i32_1 = arith.constant 0 : i32
    return %c0_i32, %c0_i32_0 : i32, i32
  }
  func.func @transform_5(%arg0: i32) -> (i32, i32) {
    %c0_i32 = arith.constant 0 : i32
    %c0_i32_0 = arith.constant 0 : i32
    %c0_i32_1 = arith.constant 0 : i32
    return %c0_i32, %c0_i32_0 : i32, i32
  }
  func.func @transform_6(%arg0: i32) -> (i32, i32) {
    %c0_i32 = arith.constant 0 : i32
    %c0_i32_0 = arith.constant 0 : i32
    return %arg0, %c0_i32 : i32, i32
  }
}

</mosaic_0001>

<llo_original>
// kernel: gru_update.1
$region0: #{gru_update.1}
  #allocation0 [shape = 'u32[]', space=smem, size = 0x4, offset = 0x4, fixed_abs, tag = 'smem constant byte address 0x4 - core index']
  #allocation1 [shape = 'u32[72,128]{1,0:T(1,128)}', space=vmem, size = 0x9000, scoped, tag = 'internal scratch']
  %s0 = inlined_call_operand.vmem [shape: f32[16,32], index: 0, kind: input, shape index: {}]
  %s1 = inlined_call_operand.vmem [shape: f32[16,32], index: 1, kind: input, shape index: {}, may-alias: {1,6}]
  %s2 = inlined_call_operand.hbm [shape: f32[32,96], index: 2, kind: input, shape index: {}]
  %s3 = inlined_call_operand.hbm [shape: f32[32,96], index: 3, kind: input, shape index: {}]
  %s4 = inlined_call_operand.vmem [shape: f32[1,96], index: 4, kind: input, shape index: {}]
  %s5 = inlined_call_operand.vmem [shape: f32[1,32], index: 5, kind: input, shape index: {}]
  %s6 = inlined_call_operand.vmem [shape: f32[16,32], index: 6, kind: output, shape index: {}, may-alias: {1,6}]
  %s7 = sld [smem:[#allocation0]]
  $region65: #{gru_update.1} parent=0
    _
  %s9 = ssub.s32 1, %s7
  %s10 = scalar_select 0, %s9, %s7
  $region1: #{gru_update.1} parent=0
    #allocation2 [shape = 'u8[16384]{0}', space=vmem, size = 0x4000, scoped, tag = 'input window, operand 2, single buffered']
    #allocation3 [shape = 's32[2]{0}', space=sflag, size = 0x8, scoped, tag = 'scoped memory for gru_update.1']
    #allocation4 [shape = 'u8[16384]{0}', space=vmem, size = 0x4000, scoped, tag = 'input window, operand 3, single buffered']
    #allocation5 [shape = 's32[1]{0}', space=sflag, size = 0x4, scoped, tag = 'scoped memory for gru_update.1']
    %11 = vsyncpa [#allocation3], 0
    %12 = vsyncpa [#allocation5], 0
    loop: start=0, step=1, limit=4
    $region2: #{gru_update.1} parent=1 // loop_pre_header
      _
    $region3: #{gru_update.1} parent=1 // loop_header
      %s14 = sphi 0, %s18
      %p15 = scmp.ge.s32.totalorder %s14, 4
      %s24 = sphi 0, %s26
      %s27 = sphi 0, %s24
      %s28 = sphi 0, %s27
      %s44 = sphi 0, %s28
      %s50 = sphi 0, %s52
      %s53 = sphi 0, %s50
      %s54 = sphi 0, %s53
      %s70 = sphi 0, %s54
      %s74 = sphi 0, %s74
      %s76 = sphi 0, %s74
      %s77 = sphi 0, %s76
      %s91 = sphi 0, %s77
      %s95 = sphi 0, %s95
      %s97 = sphi 0, %s95
      %s98 = sphi 0, %s97
      %s112 = sphi 0, %s98
      %s116 = sphi 0, %s116
      %s118 = sphi 0, %s116
      %s119 = sphi 0, %s118
      %s133 = sphi 0, %s119
      %s137 = sphi 0, %s137
      %s139 = sphi 0, %s137
      %s140 = sphi 0, %s139
      %s154 = sphi 0, %s140
      %s160 = sphi 0, %s162
      %s163 = sphi 0, %s160
      %s164 = sphi 0, %s163
      %s180 = sphi 0, %s164
    $region4: #{gru_update.1} parent=1 // loop_header_branch
      %17 = sbr.rel (%p15) target = $region8
    $region5: #{gru_update.1} parent=1 // loop_body
      %s19 = ssub.s32 %s14, 1
      %s20 = ssub.s32 %s14, 2
      %s21 = sadd.s32 %s14, 1
      %s22 = ssub.s32 %s14, %s21
      %p23 = scmp.eq.s32.totalorder %s22, 0
      %s25 = sadd.s32 %s24, 1
      %s26 = scalar_select %p23, %s24, %s25
      %p29 = pneg %p23
      %p30 = scmp.eq.s32.totalorder %s14, 1
      %p31 = por %p29, %p30
      %p32 = scmp.ne.s32.totalorder %s24, %s27
      %p33 = scmp.eq.s32.totalorder %s14, 0
      %p34 = por %p32, %p33
      %p35 = scmp.ne.s32.totalorder %s24, %s27
      %p36 = scmp.eq.s32.totalorder %s19, 1
      %p37 = por %p35, %p36
      %p38 = scmp.ne.s32.totalorder %s27, %s28
      %p39 = scmp.eq.s32.totalorder %s19, 0
      %p40 = por %p38, %p39
      %p41 = scmp.ne.s32.totalorder %s27, %s28
      %p42 = scmp.eq.s32.totalorder %s20, 1
      %p43 = por %p41, %p42
      %p45 = scmp.ne.s32.totalorder %s28, %s44
      %p46 = scmp.eq.s32.totalorder %s20, 0
      %p47 = por %p45, %p46
      %s48 = ssub.s32 %s14, %s21
      %p49 = scmp.eq.s32.totalorder %s48, 0
      %s51 = sadd.s32 %s50, 1
      %s52 = scalar_select %p49, %s50, %s51
      %p55 = pneg %p49
      %p56 = scmp.eq.s32.totalorder %s14, 1
      %p57 = por %p55, %p56
      %p58 = scmp.ne.s32.totalorder %s50, %s53
      %p59 = scmp.eq.s32.totalorder %s14, 0
      %p60 = por %p58, %p59
      %p61 = scmp.ne.s32.totalorder %s50, %s53
      %p62 = scmp.eq.s32.totalorder %s19, 1
      %p63 = por %p61, %p62
      %p64 = scmp.ne.s32.totalorder %s53, %s54
      %p65 = scmp.eq.s32.totalorder %s19, 0
      %p66 = por %p64, %p65
      %p67 = scmp.ne.s32.totalorder %s53, %s54
      %p68 = scmp.eq.s32.totalorder %s20, 1
      %p69 = por %p67, %p68
      %p71 = scmp.ne.s32.totalorder %s54, %s70
      %p72 = scmp.eq.s32.totalorder %s20, 0
      %p73 = por %p71, %p72
      %s75 = sadd.s32 %s74, 1
      %p78 = scmp.eq.s32.totalorder %s14, 1
      %p79 = scmp.ne.s32.totalorder %s74, %s76
      %p80 = scmp.eq.s32.totalorder %s14, 0
      %p81 = por %p79, %p80
      %p82 = scmp.ne.s32.totalorder %s74, %s76
      %p83 = scmp.eq.s32.totalorder %s19, 1
      %p84 = por %p82, %p83
      %p85 = scmp.ne.s32.totalorder %s76, %s77
      %p86 = scmp.eq.s32.totalorder %s19, 0
      %p87 = por %p85, %p86
      %p88 = scmp.ne.s32.totalorder %s76, %s77
      %p89 = scmp.eq.s32.totalorder %s20, 1
      %p90 = por %p88, %p89
      %p92 = scmp.ne.s32.totalorder %s77, %s91
      %p93 = scmp.eq.s32.totalorder %s20, 0
      %p94 = por %p92, %p93
      %s96 = sadd.s32 %s95, 1
      %p99 = scmp.eq.s32.totalorder %s14, 1
      %p100 = scmp.ne.s32.totalorder %s95, %s97
      %p101 = scmp.eq.s32.totalorder %s14, 0
      %p102 = por %p100, %p101
      %p103 = scmp.ne.s32.totalorder %s95, %s97
      %p104 = scmp.eq.s32.totalorder %s19, 1
      %p105 = por %p103, %p104
      %p106 = scmp.ne.s32.totalorder %s97, %s98
      %p107 = scmp.eq.s32.totalorder %s19, 0
      %p108 = por %p106, %p107
      %p109 = scmp.ne.s32.totalorder %s97, %s98
      %p110 = scmp.eq.s32.totalorder %s20, 1
      %p111 = por %p109, %p110
      %p113 = scmp.ne.s32.totalorder %s98, %s112
      %p114 = scmp.eq.s32.totalorder %s20, 0
      %p115 = por %p113, %p114
      %s117 = sadd.s32 %s116, 1
      %p120 = scmp.eq.s32.totalorder %s14, 1
      %p121 = scmp.ne.s32.totalorder %s116, %s118
      %p122 = scmp.eq.s32.totalorder %s14, 0
      %p123 = por %p121, %p122
      %p124 = scmp.ne.s32.totalorder %s116, %s118
      %p125 = scmp.eq.s32.totalorder %s19, 1
      %p126 = por %p124, %p125
      %p127 = scmp.ne.s32.totalorder %s118, %s119
      %p128 = scmp.eq.s32.totalorder %s19, 0
      %p129 = por %p127, %p128
      %p130 = scmp.ne.s32.totalorder %s118, %s119
      %p131 = scmp.eq.s32.totalorder %s20, 1
      %p132 = por %p130, %p131
      %p134 = scmp.ne.s32.totalorder %s119, %s133
      %p135 = scmp.eq.s32.totalorder %s20, 0
      %p136 = por %p134, %p135
      %s138 = sadd.s32 %s137, 1
      %p141 = scmp.eq.s32.totalorder %s14, 1
      %p142 = scmp.ne.s32.totalorder %s137, %s139
      %p143 = scmp.eq.s32.totalorder %s14, 0
      %p144 = por %p142, %p143
      %p145 = scmp.ne.s32.totalorder %s137, %s139
      %p146 = scmp.eq.s32.totalorder %s19, 1
      %p147 = por %p145, %p146
      %p148 = scmp.ne.s32.totalorder %s139, %s140
      %p149 = scmp.eq.s32.totalorder %s19, 0
      %p150 = por %p148, %p149
      %p151 = scmp.ne.s32.totalorder %s139, %s140
      %p152 = scmp.eq.s32.totalorder %s20, 1
      %p153 = por %p151, %p152
      %p155 = scmp.ne.s32.totalorder %s140, %s154
      %p156 = scmp.eq.s32.totalorder %s20, 0
      %p157 = por %p155, %p156
      %s158 = ssub.s32 %s14, %s21
      %p159 = scmp.eq.s32.totalorder %s158, 0
      %s161 = sadd.s32 %s160, 1
      %s162 = scalar_select %p159, %s160, %s161
      %p165 = pneg %p159
      %p166 = scmp.eq.s32.totalorder %s14, 1
      %p167 = por %p165, %p166
      %p168 = scmp.ne.s32.totalorder %s160, %s163
      %p169 = scmp.eq.s32.totalorder %s14, 0
      %p170 = por %p168, %p169
      %p171 = scmp.ne.s32.totalorder %s160, %s163
      %p172 = scmp.eq.s32.totalorder %s19, 1
      %p173 = por %p171, %p172
      %p174 = scmp.ne.s32.totalorder %s163, %s164
      %p175 = scmp.eq.s32.totalorder %s19, 0
      %p176 = por %p174, %p175
      %p177 = scmp.ne.s32.totalorder %s163, %s164
      %p178 = scmp.eq.s32.totalorder %s20, 1
      %p179 = por %p177, %p178
      %p181 = scmp.ne.s32.totalorder %s164, %s180
      %p182 = scmp.eq.s32.totalorder %s20, 0
      %p183 = por %p181, %p182
      %p184 = scmp.le.s32.totalorder 1, %s14
      %p185 = scmp.lt.s32.totalorder %s14, 3
      %p186 = pnand %p184, %p185
      %p187 = pneg %p186
      // Predicated region
      $region9: #{gru_update.1} parent=5 // pred_check
        _
      $region10: #{gru_update.1} parent=5 // pred_check_branch
        %189 = sbr.rel (%p186) target = $region12
      $region11: #{gru_update.1} parent=5 // pred_region
        %s190 = ssub.s32 %s14, 1
        // Predicated region
        $region13: #{gru_update.1} parent=11 // pred_check
          %p191 = pneg %p87
        $region14: #{gru_update.1} parent=11 // pred_check_branch
          %193 = sbr.rel (%p191) target = $region16
        $region15: #{gru_update.1} parent=11 // pred_region
          %195 = vsyncadd [#allocation3], 0
          %s196 = sshll.u32 %s2, 4
          %s197 = int_to_ptr.hbm [resolvable:$true] %s196
          %s198 = sshll.u32 [#allocation2], 4
          %s199 = int_to_ptr.vmem [resolvable:$true] %s198
          %204 = dma.hbm_to_vmem [thread:$0]  %s197, 512, %s199, [#allocation3], 128, 128, 8
        $region16: #{gru_update.1} parent=11 // pred_fallthru
          _
        // Predicated region
        $region17: #{gru_update.1} parent=11 // pred_check
          %p205 = pneg %p108
        $region18: #{gru_update.1} parent=11 // pred_check_branch
          %207 = sbr.rel (%p205) target = $region20
        $region19: #{gru_update.1} parent=11 // pred_region
          %209 = vsyncadd [#allocation5], 0
          %s210 = sshll.u32 %s3, 4
          %s211 = int_to_ptr.hbm [resolvable:$true] %s210
          %s212 = sshll.u32 [#allocation4], 4
          %s213 = int_to_ptr.vmem [resolvable:$true] %s212
          %218 = dma.hbm_to_vmem [thread:$0]  %s211, 512, %s213, [#allocation5], 128, 128, 8
        $region20: #{gru_update.1} parent=11 // pred_fallthru
          _
        // Predicated region
        $region21: #{gru_update.1} parent=11 // pred_check
          %p219 = pneg %p129
        $region22: #{gru_update.1} parent=11 // pred_check_branch
          %221 = sbr.rel (%p219) target = $region24
        $region23: #{gru_update.1} parent=11 // pred_region
          _
        $region24: #{gru_update.1} parent=11 // pred_fallthru
          _
        // Predicated region
        $region25: #{gru_update.1} parent=11 // pred_check
          %p222 = pneg %p150
        $region26: #{gru_update.1} parent=11 // pred_check_branch
          %224 = sbr.rel (%p222) target = $region28
        $region27: #{gru_update.1} parent=11 // pred_region
          _
        $region28: #{gru_update.1} parent=11 // pred_fallthru
          _
      $region12: #{gru_update.1} parent=5 // pred_fallthru
        _
      %p225 = scmp.lt.s32.totalorder %s14, 2
      // Predicated region
      $region29: #{gru_update.1} parent=5 // pred_check
        %p226 = pneg %p225
      $region30: #{gru_update.1} parent=5 // pred_check_branch
        %228 = sbr.rel (%p226) target = $region32
      $region31: #{gru_update.1} parent=5 // pred_region
        // Predicated region
        $region33: #{gru_update.1} parent=31 // pred_check
          %p229 = pneg %p34
        $region34: #{gru_update.1} parent=31 // pred_check_branch
          %231 = sbr.rel (%p229) target = $region36
        $region35: #{gru_update.1} parent=31 // pred_region
          %p232 = scmp.lt.s32.totalorder %s14, 1
          %s233 = scalar_select %p232, %s14, 1
          %s234 = smul.addr %s233, 8
          %s235 = scalar_lea.vmem %s0, %s234
        $region36: #{gru_update.1} parent=31 // pred_fallthru
          _
        // Predicated region
        $region37: #{gru_update.1} parent=31 // pred_check
          %p236 = pneg %p60
        $region38: #{gru_update.1} parent=31 // pred_check_branch
          %238 = sbr.rel (%p236) target = $region40
        $region39: #{gru_update.1} parent=31 // pred_region
          %p239 = scmp.lt.s32.totalorder %s14, 1
          %s240 = scalar_select %p239, %s14, 1
          %s241 = smul.addr %s240, 8
          %s242 = scalar_lea.vmem %s1, %s241
        $region40: #{gru_update.1} parent=31 // pred_fallthru
          _
      $region32: #{gru_update.1} parent=5 // pred_fallthru
        _
      %p243 = scmp.le.s32.totalorder 1, %s14
      %p244 = scmp.lt.s32.totalorder %s14, 3
      %p245 = pnand %p243, %p244
      %p246 = pneg %p245
      // Predicated region
      $region41: #{gru_update.1} parent=5 // pred_check
        _
      $region42: #{gru_update.1} parent=5 // pred_check_branch
        %248 = sbr.rel (%p245) target = $region44
      $region43: #{gru_update.1} parent=5 // pred_region
        %s249 = ssub.s32 %s14, 1
        // Predicated region
        $region45: #{gru_update.1} parent=43 // pred_check
          %p250 = pneg %p87
        $region46: #{gru_update.1} parent=43 // pred_check_branch
          %252 = sbr.rel (%p250) target = $region48
        $region47: #{gru_update.1} parent=43 // pred_region
          %254 = dma.done [#allocation3], 512
        $region48: #{gru_update.1} parent=43 // pred_fallthru
          _
        // Predicated region
        $region49: #{gru_update.1} parent=43 // pred_check
          %p255 = pneg %p108
        $region50: #{gru_update.1} parent=43 // pred_check_branch
          %257 = sbr.rel (%p255) target = $region52
        $region51: #{gru_update.1} parent=43 // pred_region
          %259 = dma.done [#allocation5], 512
        $region52: #{gru_update.1} parent=43 // pred_fallthru
          _
        %p260 = scmp.lt.s32.totalorder %s19, 1
        %s261 = scalar_select %p260, %s19, 1
        %s262 = smul.addr %s261, 8
        %s263 = scalar_lea.vmem %s0, %s262
        %p264 = pneg %p40
        %p265 = pneg %p37
        %p266 = scmp.lt.s32.totalorder %s19, 1
        %s267 = scalar_select %p266, %s19, 1
        %s268 = smul.addr %s267, 8
        %s269 = scalar_lea.vmem %s1, %s268
        %p270 = pneg %p66
        %p271 = pneg %p63
        %p272 = pneg %p87
        %p273 = pneg %p84
        %p274 = pneg %p108
        %p275 = pneg %p105
        %p276 = pneg %p129
        %p277 = pneg %p126
        %p278 = pneg %p150
        %p279 = pneg %p147
        %p280 = pneg %p176
        %p281 = pneg %p173
        %p282 = scmp.lt.s32.totalorder %s19, 1
        %s283 = scalar_select %p282, %s19, 1
        %s284 = smul.addr %s283, 8
        %s285 = scalar_lea.vmem %s6, %s284
        %p286 = scmp.lt.s32.totalorder %s19, 1
        %s287 = scalar_select %p286, %s19, 1
        %s288 = smul.addr %s287, 8
        %s289 = scalar_lea.vmem %s0, %s288
        %p290 = scmp.lt.s32.totalorder %s19, 1
        %s291 = scalar_select %p290, %s19, 1
        %s292 = smul.addr %s291, 8
        %s293 = scalar_lea.vmem %s1, %s292
        %p294 = scmp.lt.s32.totalorder %s19, 1
        %s295 = scalar_select %p294, %s19, 1
        %s296 = smul.addr %s295, 8
        %s297 = scalar_lea.vmem %s6, %s296
        %v298 = vld [vmem:[%s289] sm:$0xff]
        %v299 = vld [vmem:[%s293] sm:$0xff]
        %v300 = vld [vmem:[#allocation2] sm:$0xff]
        %v301 = vld [vmem:[#allocation2 + $0x8] sm:$0xff]
        %v302 = vld [vmem:[#allocation2 + $0x10] sm:$0xff]
        %v303 = vld [vmem:[#allocation2 + $0x18] sm:$0xff]
        %v304 = vld [vmem:[%s4] sm:$0x1]
        %v306 = vperm.slane %v304, 0
        %vm308 = vcmask 261120
        %v310 = vsel %vm308, %v298, 0
        %312 = vmatpush.msra.mxu0 0.0
        %313 = vmatpush.msra.mxu0 0.0
        %314 = vmatpush.msra.mxu0 0.0
        %315 = vmatpush.msra.mxu0 0.0
        %316 = vmatpush.msra.mxu0 0.0
        %317 = vmatpush.msra.mxu0 0.0
        %318 = vmatpush.msra.mxu0 0.0
        %319 = vmatpush.msra.mxu0 0.0
        %320 = vmatpush.msra.mxu0 0.0
        %321 = vmatpush.msra.mxu0 0.0
        %322 = vmatpush.msra.mxu0 0.0
        %323 = vmatpush.msra.mxu0 0.0
        %324 = vmatpush.msra.mxu0 %v303
        %325 = vmatpush.msra.mxu0 %v302
        %326 = vmatpush.msra.mxu0 %v301
        %327 = vmatpush.msra.mxu0 %v300
        %328 = vmatmul.f32.gmra.mxu0 %v310
        %v329 = vpop.f32.mrf.mxu0
        %v330 = vadd.f32 %v306, %v329
        %331 = vdwg.mxu0
        %v332 = vld [vmem:[#allocation4] sm:$0xff]
        %v333 = vld [vmem:[#allocation4 + $0x8] sm:$0xff]
        %v334 = vld [vmem:[#allocation4 + $0x10] sm:$0xff]
        %v335 = vld [vmem:[#allocation4 + $0x18] sm:$0xff]
        %v337 = vsel %vm308, %v299, 0
        %339 = vmatpush.msra.mxu0 0.0
        %340 = vmatpush.msra.mxu0 0.0
        %341 = vmatpush.msra.mxu0 0.0
        %342 = vmatpush.msra.mxu0 0.0
        %343 = vmatpush.msra.mxu0 0.0
        %344 = vmatpush.msra.mxu0 0.0
        %345 = vmatpush.msra.mxu0 0.0
        %346 = vmatpush.msra.mxu0 0.0
        %347 = vmatpush.msra.mxu0 0.0
        %348 = vmatpush.msra.mxu0 0.0
        %349 = vmatpush.msra.mxu0 0.0
        %350 = vmatpush.msra.mxu0 0.0
        %351 = vmatpush.msra.mxu0 %v335
        %352 = vmatpush.msra.mxu0 %v334
        %353 = vmatpush.msra.mxu0 %v333
        %354 = vmatpush.msra.mxu0 %v332
        %355 = vmatmul.f32.gmra.mxu0 %v337
        %v356 = vpop.f32.mrf.mxu0
        %v357 = vadd.f32 0.0, %v356
        %358 = vdwg.mxu0
        %v359 = vadd.f32 %v330, %v357
        %v360 = vxor.u32 %v359, 2147483648
        %v361 = vmul.f32 %v360, 1.442695
        %v362 = vpow.pop %v361
        %v363 = vadd.f32 %v362, 1.0
        %v364 = vrcp.pop %v363
        %v365 = vmul.f32 %v363, %v364
        %v366 = vsub.f32 1.0, %v365
        %v367 = vmul.f32 %v364, %v366
        %v368 = vadd.f32 %v364, %v367
        %vm369 = vweird.f32 %v363
        %vm370 = vweird.f32 %v364
        %vm371 = vmor %vm369, %vm370
        %v372 = vsel %vm371, %v364, %v368
        %v373 = vand.u32 2147483647, %v363
        %vm374 = vcmp.eq.f32.partialorder %v373, 8.507059e+37
        %v375 = vand.u32 %v363, 2147483648
        %v376 = vor.u32 1.1754944e-38, %v375
        %v377 = vsel %vm374, %v376, %v372
        %v378 = vmul.f32 1.0, %v377
        %v379 = vld [vmem:[%s5] sm:$0x1]
        %v381 = vperm.slane %v379, 0
        %382 = vrot.lane.b32.xlu0 %v381, 64
        %v383 = vpop.permute.xlu0 %382
        %v385 = vadd.f32 %v357, %v383
        %387 = vrot.lane.b32.xlu0 %v385, 64
        %v388 = vpop.permute.xlu0 %387
        %v390 = vmul.f32 %v378, %v388
        %392 = vrot.lane.b32.xlu0 %v390, 64
        %v393 = vpop.permute.xlu0 %392
        %v395 = vadd.f32 %v330, %v393
        %v396 = vtanh.pop %v395
        %v397 = vsub.f32 1.0, %v378
        %399 = vrot.lane.b32.xlu0 %v396, 96
        %v400 = vpop.permute.xlu0 %399
        %v402 = vmul.f32 %v397, %v400
        %403 = vrot.lane.b32.xlu0 %v299, 32
        %v404 = vpop.permute.xlu0 %403
        %v406 = vmul.f32 %v378, %v404
        %v407 = vadd.f32 %v402, %v406
        %409 = vrot.lane.b32.xlu0 %v407, 96
        %v410 = vpop.permute.xlu0 %409
        %412 = vst.msk [vmem:[%s297] sm:$0xff] %vm308, %v410
        %p413 = scmp.lt.s32.totalorder %s19, 1
        %s414 = scalar_select %p413, %s19, 1
        %s415 = smul.addr %s414, 8
        %s416 = scalar_lea.vmem %s6, %s415
        // Predicated region
        $region53: #{gru_update.1} parent=43 // pred_check
          %p417 = pneg %p173
        $region54: #{gru_update.1} parent=43 // pred_check_branch
          %419 = sbr.rel (%p417) target = $region56
        $region55: #{gru_update.1} parent=43 // pred_region
          _
        $region56: #{gru_update.1} parent=43 // pred_fallthru
          _
      $region44: #{gru_update.1} parent=5 // pred_fallthru
        _
      %p420 = scmp.le.s32.totalorder 2, %s14
      // Predicated region
      $region57: #{gru_update.1} parent=5 // pred_check
        %p421 = pneg %p420
      $region58: #{gru_update.1} parent=5 // pred_check_branch
        %423 = sbr.rel (%p421) target = $region60
      $region59: #{gru_update.1} parent=5 // pred_region
        %s424 = ssub.s32 %s14, 2
        // Predicated region
        $region61: #{gru_update.1} parent=59 // pred_check
          %p425 = pneg %p179
        $region62: #{gru_update.1} parent=59 // pred_check_branch
          %427 = sbr.rel (%p425) target = $region64
        $region63: #{gru_update.1} parent=59 // pred_region
          %p428 = scmp.lt.s32.totalorder %s20, 1
          %s429 = scalar_select %p428, %s20, 1
          %s430 = smul.addr %s429, 8
          %s431 = scalar_lea.vmem %s6, %s430
        $region64: #{gru_update.1} parent=59 // pred_fallthru
          _
      $region60: #{gru_update.1} parent=5 // pred_fallthru
        _
    $region6: #{gru_update.1} parent=1 // loop_footer
      %s18 = sadd.s32 1, %s14
    $region7: #{gru_update.1} parent=1 // loop_footer_branch
      %13 = sbr.rel target = $region3
    $region8: #{gru_update.1} parent=1 // loop_exit
      _
    %432 = vsyncpa [#allocation3], 1
    %s433 = scalar_lea.sflag [#allocation3], 1
    %434 = vsyncpa %s433, 1
    %435 = vsyncpa [#allocation5], 1

</llo_original>
